<compile_context>
chip_gen: v6e
topology: v6e:2x2x1
jax: 0.10.0
libtpu: 0.0.40
codegen_flags: <defaults>
</compile_context>

<pallas_src>
import jax
import jax.numpy as jnp
from jax.experimental import pallas as pl
from jax.experimental.pallas import tpu as pltpu


def _round_up(x, m):
    return ((x + m - 1) // m) * m


# ---------------------------------------------------------------------------
# Kernel: one (batch_tile, timestep) grid cell per invocation.
# ---------------------------------------------------------------------------
def _recurrent_lif_seq_kernel(
    xs_ref,       # (BT, Ip)     input at timestep t (leading time dim squeezed)
    wcat_ref,     # (Ip+Op, Op)  [W_ff^T ; W_rec^T], zero-padded, VMEM-resident
    bias_ref,     # (BT, Op)     pre-broadcast bias
    leak_i_ref,   # (BT, Op)
    leak_v_ref,   # (BT, Op)
    thresh_ref,   # (BT, Op)     padded lanes hold a huge value -> never spike
    i0_ref,       # (BT, Op)     initial synaptic current
    v0_ref,       # (BT, Op)     initial membrane potential
    s0_ref,       # (BT, Op)     initial spikes
    out_ref,      # (BT, Op)     spike output at timestep t (time dim squeezed)
    i_ref,        # (BT, Op)     resident current state (written back once per b)
    v_ref,        # (BT, Op)     resident membrane state
    s_scr,        # (BT, Op)     VMEM scratch carrying spikes across timesteps
):
    t = pl.program_id(1)

    @pl.when(t == 0)
    def _init():
        i_ref[...] = i0_ref[...]
        v_ref[...] = v0_ref[...]
        s_scr[...] = s0_ref[...]

    x = xs_ref[...]
    s_prev = s_scr[...]

    # One MXU push: drive = [x, s_prev] @ [W_ff^T ; W_rec^T] + b
    # TODO(synk): for large layers cast the dot operands / wcat to bfloat16
    # (spikes are exactly 0/1 so the recurrent path stays exact) — kept f32 here
    # so the f32 reference check stays tight.
    xcat = jnp.concatenate([x, s_prev], axis=-1)
    drive = jnp.dot(xcat, wcat_ref[...], preferred_element_type=jnp.float32)
    drive = drive + bias_ref[...]

    # LIF neuron update (element-wise, VPU, f32)
    i_new = leak_i_ref[...] * i_ref[...] + drive
    v_new = leak_v_ref[...] * v_ref[...] * (1.0 - s_prev) + i_new
    s_new = (v_new >= thresh_ref[...]).astype(jnp.float32)

    i_ref[...] = i_new
    v_ref[...] = v_new
    s_scr[...] = s_new
    out_ref[...] = s_new


# ---------------------------------------------------------------------------
# One-time parameter preparation (hoisted out of the hot path).
# ---------------------------------------------------------------------------
def prepare_params(params, batch_size, dtype=jnp.float32):
    """Transpose + concat + pad weights, pre-broadcast neuron params. Call once."""
    out_size, in_size = params["w_ff"].shape
    ip = _round_up(in_size, 128)
    op = _round_up(out_size, 128)
    bp = _round_up(max(batch_size, 8), 8)
    if bp > 128:
        bp = _round_up(bp, 128)
    bt = min(bp, 128)  # batch tile (sublane-aligned)

    wcat = jnp.zeros((ip + op, op), dtype)
    wcat = wcat.at[:in_size, :out_size].set(params["w_ff"].T.astype(dtype))
    wcat = wcat.at[ip:ip + out_size, :out_size].set(params["w_rec"].T.astype(dtype))

    def row(v, fill=0.0):
        r = jnp.full((op,), fill, dtype).at[:out_size].set(v.astype(dtype))
        return jnp.broadcast_to(r, (bp, op))

    return dict(
        wcat=wcat,
        bias=row(params["b_ff"]),
        leak_i=row(params["leak_i"]),
        leak_v=row(params["leak_v"]),
        thresh=row(params["thresh"], fill=1e30),  # padded neurons never spike
        in_size=in_size, out_size=out_size,
        ip=ip, op=op, bp=bp, bt=bt,
    )


# ---------------------------------------------------------------------------
# Fused-sequence wrapper: one pallas_call for all T timesteps.
# ---------------------------------------------------------------------------
def recurrent_linear_sequence(packed, state, xs):
    """Run BaseRecurrentLinear over a full sequence.

    packed : output of prepare_params
    state  : None or (i, v, s), each (B, Out)
    xs     : (T, B, In)
    returns ((i, v, s), outputs) with outputs (T, B, Out)
    """
    T, B, In = xs.shape
    Out = packed["out_size"]
    ip, op, bp, bt = packed["ip"], packed["op"], packed["bp"], packed["bt"]
    dt = jnp.float32
    nb = bp // bt

    xs_p = jnp.zeros((T, bp, ip), dt).at[:, :B, :In].set(xs.astype(dt))

    def pad_state(a):
        return jnp.zeros((bp, op), dt).at[:B, :Out].set(a.astype(dt))

    if state is None:
        z = jnp.zeros((bp, op), dt)
        i0, v0, s0 = z, z, z
    else:
        i0, v0, s0 = (pad_state(a) for a in state)

    state_spec = pl.BlockSpec((bt, op), lambda b, t: (b, 0))
    weight_spec = pl.BlockSpec((ip + op, op), lambda b, t: (0, 0))       # resident
    seq_in_spec = pl.BlockSpec((pl.Squeezed(), bt, ip), lambda b, t: (t, b, 0))
    seq_out_spec = pl.BlockSpec((pl.Squeezed(), bt, op), lambda b, t: (t, b, 0))

    out_p, i_p, v_p = pl.pallas_call(
        _recurrent_lif_seq_kernel,
        grid=(nb, T),
        in_specs=[
            seq_in_spec,     # xs (per-step tile)
            weight_spec,     # wcat: DMA'd once, stays in VMEM
            state_spec,      # bias
            state_spec,      # leak_i
            state_spec,      # leak_v
            state_spec,      # thresh
            state_spec,      # i0
            state_spec,      # v0
            state_spec,      # s0
        ],
        out_specs=(
            seq_out_spec,    # spike train (T, Bp, Op)
            state_spec,      # final i (resident across time axis)
            state_spec,      # final v
        ),
        out_shape=(
            jax.ShapeDtypeStruct((T, bp, op), dt),
            jax.ShapeDtypeStruct((bp, op), dt),
            jax.ShapeDtypeStruct((bp, op), dt),
        ),
        scratch_shapes=[pltpu.VMEM((bt, op), dt)],
        compiler_params=pltpu.CompilerParams(
            dimension_semantics=("parallel", "arbitrary"),
            vmem_limit_bytes=32 * 1024 * 1024,
        ),
    )(xs_p, packed["wcat"], packed["bias"], packed["leak_i"],
      packed["leak_v"], packed["thresh"], i0, v0, s0)

    outputs = out_p[:, :B, :Out]
    i_new = i_p[:B, :Out]
    v_new = v_p[:B, :Out]
    s_new = outputs[T - 1]   # spike state == last output slice (no dup writeback)
    return (i_new, v_new, s_new), outputs


def base_recurrent_linear_forward(packed, state, input_):
    """Single-timestep forward matching the original module's signature."""
    (i, v, s), out = recurrent_linear_sequence(packed, state, input_[None])
    return (i, v, s), out[0]


# ---------------------------------------------------------------------------
# Deterministic params (mirrors nn.Linear defaults; no checkpoint) + reference.
# ---------------------------------------------------------------------------
def init_params(key, input_size, output_size, bias_enabled=True):
    k1, k2, k3, k4, k5, k6 = jax.random.split(key, 6)
    bound_ff = 1.0 / jnp.sqrt(input_size)
    bound_rec = 1.0 / jnp.sqrt(output_size)
    w_ff = jax.random.uniform(k1, (output_size, input_size),
                              minval=-bound_ff, maxval=bound_ff, dtype=jnp.float32)
    b_ff = (jax.random.uniform(k2, (output_size,),
                               minval=-bound_ff, maxval=bound_ff, dtype=jnp.float32)
            if bias_enabled else jnp.zeros((output_size,), jnp.float32))
    w_rec = jax.random.uniform(k3, (output_size, output_size),
                               minval=-bound_rec, maxval=bound_rec, dtype=jnp.float32)
    leak_i = jax.random.uniform(k4, (output_size,), minval=0.5, maxval=0.95)
    leak_v = jax.random.uniform(k5, (output_size,), minval=0.5, maxval=0.95)
    thresh = jax.random.uniform(k6, (output_size,), minval=0.3, maxval=1.0)
    return dict(w_ff=w_ff, b_ff=b_ff, w_rec=w_rec,
                leak_i=leak_i, leak_v=leak_v, thresh=thresh)


def reference_forward(params, state, input_):
    """Pure-JAX single-step reference."""
    ff = jnp.dot(input_, params["w_ff"].T,
                 precision=jax.lax.Precision.HIGHEST) + params["b_ff"]
    B, Out = ff.shape
    if state is None:
        z = jnp.zeros((B, Out), jnp.float32)
        state = (z, z, z)
    i, v, s = state
    rec = jnp.dot(s, params["w_rec"].T, precision=jax.lax.Precision.HIGHEST)
    drive = ff + rec
    i_new = params["leak_i"] * i + drive
    v_new = params["leak_v"] * v * (1.0 - s) + i_new
    s_new = (v_new >= params["thresh"]).astype(jnp.float32)
    return (i_new, v_new, s_new), s_new


if __name__ == "__main__":
    input_size, output_size, batch, seq = 16, 32, 2, 8

    key = jax.random.PRNGKey(0)
    kp, kx = jax.random.split(key)
    params = init_params(kp, input_size, output_size, bias_enabled=True)
    xs = jax.random.normal(kx, (seq, batch, input_size), dtype=jnp.float32)

    # One-time parameter prep (transpose/concat/pad/broadcast hoisted here).
    packed = prepare_params(params, batch)

    # Fused kernel: whole sequence in one pallas_call, weights loaded once.
    (i_k, v_k, s_k), outs_k = recurrent_linear_sequence(packed, None, xs)
    jax.block_until_ready(outs_k)

    # Pure-JAX reference, stepped in Python.
    state_ref = None
    outs_ref = []
    for t in range(seq):
        state_ref, o = reference_forward(params, state_ref, xs[t])
        outs_ref.append(o)
    outs_ref = jnp.stack(outs_ref)

    ok = bool(jnp.allclose(outs_k, outs_ref, atol=1e-4))
    ok &= bool(jnp.allclose(i_k, state_ref[0], atol=1e-4))
    ok &= bool(jnp.allclose(v_k, state_ref[1], atol=1e-4))
    ok &= bool(jnp.allclose(s_k, state_ref[2], atol=1e-4))

    print("KERNEL_OK" if ok else "MISMATCH")
</pallas_src>

<mosaic_0001>
module attributes {stable_mosaic.version = 11 : i64} {
  func.func @_recurrent_lif_seq_kernel(%arg0: i32, %arg1: i32, %arg2: memref<1x8x128xf32, #tpu.memory_space<vmem>>, %arg3: memref<256x128xf32, #tpu.memory_space<vmem>>, %arg4: memref<8x128xf32, #tpu.memory_space<vmem>>, %arg5: memref<8x128xf32, #tpu.memory_space<vmem>>, %arg6: memref<8x128xf32, #tpu.memory_space<vmem>>, %arg7: memref<8x128xf32, #tpu.memory_space<vmem>>, %arg8: memref<8x128xf32, #tpu.memory_space<vmem>>, %arg9: memref<8x128xf32, #tpu.memory_space<vmem>>, %arg10: memref<8x128xf32, #tpu.memory_space<vmem>>, %arg11: memref<1x8x128xf32, #tpu.memory_space<vmem>>, %arg12: memref<8x128xf32, #tpu.memory_space<vmem>>, %arg13: memref<8x128xf32, #tpu.memory_space<vmem>>, %arg14: memref<8x128xf32, #tpu.memory_space<vmem>>) attributes {dimension_semantics = [#tpu.dimension_semantics<parallel>, #tpu.dimension_semantics<arbitrary>], iteration_bounds = array<i64: 1, 8>, scalar_prefetch = 0 : i64, scratch_operands = 1 : i64, tpu.core_type = #tpu.core_type<tc>, window_params = [{transform_indices = @transform_0, window_bounds = array<i64: 1, 8, 128>}, {pipeline_mode = #tpu.pipeline_mode<synchronous>, transform_indices = @transform_1, window_bounds = array<i64: 256, 128>}, {transform_indices = @transform_2, window_bounds = array<i64: 8, 128>}, {transform_indices = @transform_3, window_bounds = array<i64: 8, 128>}, {transform_indices = @transform_4, window_bounds = array<i64: 8, 128>}, {transform_indices = @transform_5, window_bounds = array<i64: 8, 128>}, {transform_indices = @transform_6, window_bounds = array<i64: 8, 128>}, {transform_indices = @transform_7, window_bounds = array<i64: 8, 128>}, {transform_indices = @transform_8, window_bounds = array<i64: 8, 128>}, {transform_indices = @transform_9, window_bounds = array<i64: 1, 8, 128>}, {transform_indices = @transform_10, window_bounds = array<i64: 8, 128>}, {transform_indices = @transform_11, window_bounds = array<i64: 8, 128>}]} {
    %c0_i32 = arith.constant 0 : i32
    %0 = arith.cmpi eq, %arg1, %c0_i32 : i32
    %1 = arith.extui %0 : i1 to i32
    %c0_i32_0 = arith.constant 0 : i32
    %2 = arith.cmpi ne, %1, %c0_i32_0 : i32
    scf.if %2 {
      %c0_29 = arith.constant 0 : index
      %c0_30 = arith.constant 0 : index
      %32 = vector.load %arg8[%c0_29, %c0_30] : memref<8x128xf32, #tpu.memory_space<vmem>>, vector<8x128xf32>
      %c0_31 = arith.constant 0 : index
      %c0_32 = arith.constant 0 : index
      %33 = vector.load %arg12[%c0_31, %c0_32] : memref<8x128xf32, #tpu.memory_space<vmem>>, vector<8x128xf32>
      tpu.vector_store %arg12[%c0_31, %c0_32], %32 {strides = array<i32>} : memref<8x128xf32, #tpu.memory_space<vmem>>, vector<8x128xf32>,
      %c0_33 = arith.constant 0 : index
      %c0_34 = arith.constant 0 : index
      %34 = vector.load %arg9[%c0_33, %c0_34] : memref<8x128xf32, #tpu.memory_space<vmem>>, vector<8x128xf32>
      %c0_35 = arith.constant 0 : index
      %c0_36 = arith.constant 0 : index
      %35 = vector.load %arg13[%c0_35, %c0_36] : memref<8x128xf32, #tpu.memory_space<vmem>>, vector<8x128xf32>
      tpu.vector_store %arg13[%c0_35, %c0_36], %34 {strides = array<i32>} : memref<8x128xf32, #tpu.memory_space<vmem>>, vector<8x128xf32>,
      %c0_37 = arith.constant 0 : index
      %c0_38 = arith.constant 0 : index
      %36 = vector.load %arg10[%c0_37, %c0_38] : memref<8x128xf32, #tpu.memory_space<vmem>>, vector<8x128xf32>
      %c0_39 = arith.constant 0 : index
      %c0_40 = arith.constant 0 : index
      %37 = vector.load %arg14[%c0_39, %c0_40] : memref<8x128xf32, #tpu.memory_space<vmem>>, vector<8x128xf32>
      tpu.vector_store %arg14[%c0_39, %c0_40], %36 {strides = array<i32>} : memref<8x128xf32, #tpu.memory_space<vmem>>, vector<8x128xf32>,
    } else {
    }
    %c0 = arith.constant 0 : index
    %c0_1 = arith.constant 0 : index
    %c0_2 = arith.constant 0 : index
    %3 = vector.load %arg2[%c0, %c0_1, %c0_2] : memref<1x8x128xf32, #tpu.memory_space<vmem>>, vector<1x8x128xf32>
    %4 = vector.shape_cast %3 : vector<1x8x128xf32> to vector<8x128xf32>
    %c0_3 = arith.constant 0 : index
    %c0_4 = arith.constant 0 : index
    %5 = vector.load %arg14[%c0_3, %c0_4] : memref<8x128xf32, #tpu.memory_space<vmem>>, vector<8x128xf32>
    %6 = tpu.concatenate %4, %5 in 1 : vector<8x128xf32>, vector<8x128xf32> -> vector<8x256xf32>
    %c0_5 = arith.constant 0 : index
    %c0_6 = arith.constant 0 : index
    %7 = vector.load %arg3[%c0_5, %c0_6] : memref<256x128xf32, #tpu.memory_space<vmem>>, vector<256x128xf32>
    %cst = arith.constant dense<0.000000e+00> : vector<8x128xf32>
    %8 = tpu.matmul %6, %7, %cst {dimension_numbers = #tpu.dot_dimension_numbers<[1], [0], [0], [1], [0, 0, 1, 1], [], []>} : vector<8x256xf32>, vector<256x128xf32>, vector<8x128xf32> -> vector<8x128xf32>
    %c0_7 = arith.constant 0 : index
    %c0_8 = arith.constant 0 : index
    %9 = vector.load %arg4[%c0_7, %c0_8] : memref<8x128xf32, #tpu.memory_space<vmem>>, vector<8x128xf32>
    %10 = arith.addf %8, %9 : vector<8x128xf32>
    %c0_9 = arith.constant 0 : index
    %c0_10 = arith.constant 0 : index
    %11 = vector.load %arg5[%c0_9, %c0_10] : memref<8x128xf32, #tpu.memory_space<vmem>>, vector<8x128xf32>
    %c0_11 = arith.constant 0 : index
    %c0_12 = arith.constant 0 : index
    %12 = vector.load %arg12[%c0_11, %c0_12] : memref<8x128xf32, #tpu.memory_space<vmem>>, vector<8x128xf32>
    %13 = arith.mulf %11, %12 : vector<8x128xf32>
    %14 = arith.addf %13, %10 : vector<8x128xf32>
    %c0_13 = arith.constant 0 : index
    %c0_14 = arith.constant 0 : index
    %15 = vector.load %arg6[%c0_13, %c0_14] : memref<8x128xf32, #tpu.memory_space<vmem>>, vector<8x128xf32>
    %c0_15 = arith.constant 0 : index
    %c0_16 = arith.constant 0 : index
    %16 = vector.load %arg13[%c0_15, %c0_16] : memref<8x128xf32, #tpu.memory_space<vmem>>, vector<8x128xf32>
    %17 = arith.mulf %15, %16 : vector<8x128xf32>
    %cst_17 = arith.constant 1.000000e+00 : f32
    %18 = vector.broadcast %cst_17 : f32 to vector<8x128xf32>
    %19 = arith.subf %18, %5 : vector<8x128xf32>
    %20 = arith.mulf %17, %19 : vector<8x128xf32>
    %21 = arith.addf %20, %14 : vector<8x128xf32>
    %c0_18 = arith.constant 0 : index
    %c0_19 = arith.constant 0 : index
    %22 = vector.load %arg7[%c0_18, %c0_19] : memref<8x128xf32, #tpu.memory_space<vmem>>, vector<8x128xf32>
    %23 = arith.cmpf oge, %21, %22 : vector<8x128xf32>
    %24 = arith.extui %23 : vector<8x128xi1> to vector<8x128xi32>
    %25 = arith.sitofp %24 : vector<8x128xi32> to vector<8x128xf32>
    %c0_20 = arith.constant 0 : index
    %c0_21 = arith.constant 0 : index
    %26 = vector.load %arg12[%c0_20, %c0_21] : memref<8x128xf32, #tpu.memory_space<vmem>>, vector<8x128xf32>
    tpu.vector_store %arg12[%c0_20, %c0_21], %14 {strides = array<i32>} : memref<8x128xf32, #tpu.memory_space<vmem>>, vector<8x128xf32>,
    %c0_22 = arith.constant 0 : index
    %c0_23 = arith.constant 0 : index
    %27 = vector.load %arg13[%c0_22, %c0_23] : memref<8x128xf32, #tpu.memory_space<vmem>>, vector<8x128xf32>
    tpu.vector_store %arg13[%c0_22, %c0_23], %21 {strides = array<i32>} : memref<8x128xf32, #tpu.memory_space<vmem>>, vector<8x128xf32>,
    %c0_24 = arith.constant 0 : index
    %c0_25 = arith.constant 0 : index
    %28 = vector.load %arg14[%c0_24, %c0_25] : memref<8x128xf32, #tpu.memory_space<vmem>>, vector<8x128xf32>
    tpu.vector_store %arg14[%c0_24, %c0_25], %25 {strides = array<i32>} : memref<8x128xf32, #tpu.memory_space<vmem>>, vector<8x128xf32>,
    %c0_26 = arith.constant 0 : index
    %c0_27 = arith.constant 0 : index
    %c0_28 = arith.constant 0 : index
    %29 = vector.load %arg11[%c0_26, %c0_27, %c0_28] : memref<1x8x128xf32, #tpu.memory_space<vmem>>, vector<1x8x128xf32>
    %30 = vector.shape_cast %29 : vector<1x8x128xf32> to vector<8x128xf32>
    %31 = vector.shape_cast %25 : vector<8x128xf32> to vector<1x8x128xf32>
    tpu.vector_store %arg11[%c0_26, %c0_27, %c0_28], %31 {strides = array<i32>} : memref<1x8x128xf32, #tpu.memory_space<vmem>>, vector<1x8x128xf32>,
    return
  }
  func.func @transform_0(%arg0: i32, %arg1: i32) -> (i32, i32, i32) {
    %c0_i32 = arith.constant 0 : i32
    %c0_i32_0 = arith.constant 0 : i32
    return %arg1, %arg0, %c0_i32 : i32, i32, i32
  }
  func.func @transform_1(%arg0: i32, %arg1: i32) -> (i32, i32) {
    %c0_i32 = arith.constant 0 : i32
    %c0_i32_0 = arith.constant 0 : i32
    %c0_i32_1 = arith.constant 0 : i32
    return %c0_i32, %c0_i32_0 : i32, i32
  }
  func.func @transform_2(%arg0: i32, %arg1: i32) -> (i32, i32) {
    %c0_i32 = arith.constant 0 : i32
    %c0_i32_0 = arith.constant 0 : i32
    return %arg0, %c0_i32 : i32, i32
  }
  func.func @transform_3(%arg0: i32, %arg1: i32) -> (i32, i32) {
    %c0_i32 = arith.constant 0 : i32
    %c0_i32_0 = arith.constant 0 : i32
    return %arg0, %c0_i32 : i32, i32
  }
  func.func @transform_4(%arg0: i32, %arg1: i32) -> (i32, i32) {
    %c0_i32 = arith.constant 0 : i32
    %c0_i32_0 = arith.constant 0 : i32
    return %arg0, %c0_i32 : i32, i32
  }
  func.func @transform_5(%arg0: i32, %arg1: i32) -> (i32, i32) {
    %c0_i32 = arith.constant 0 : i32
    %c0_i32_0 = arith.constant 0 : i32
    return %arg0, %c0_i32 : i32, i32
  }
  func.func @transform_6(%arg0: i32, %arg1: i32) -> (i32, i32) {
    %c0_i32 = arith.constant 0 : i32
    %c0_i32_0 = arith.constant 0 : i32
    return %arg0, %c0_i32 : i32, i32
  }
  func.func @transform_7(%arg0: i32, %arg1: i32) -> (i32, i32) {
    %c0_i32 = arith.constant 0 : i32
    %c0_i32_0 = arith.constant 0 : i32
    return %arg0, %c0_i32 : i32, i32
  }
  func.func @transform_8(%arg0: i32, %arg1: i32) -> (i32, i32) {
    %c0_i32 = arith.constant 0 : i32
    %c0_i32_0 = arith.constant 0 : i32
    return %arg0, %c0_i32 : i32, i32
  }
  func.func @transform_9(%arg0: i32, %arg1: i32) -> (i32, i32, i32) {
    %c0_i32 = arith.constant 0 : i32
    %c0_i32_0 = arith.constant 0 : i32
    return %arg1, %arg0, %c0_i32 : i32, i32, i32
  }
  func.func @transform_10(%arg0: i32, %arg1: i32) -> (i32, i32) {
    %c0_i32 = arith.constant 0 : i32
    %c0_i32_0 = arith.constant 0 : i32
    return %arg0, %c0_i32 : i32, i32
  }
  func.func @transform_11(%arg0: i32, %arg1: i32) -> (i32, i32) {
    %c0_i32 = arith.constant 0 : i32
    %c0_i32_0 = arith.constant 0 : i32
    return %arg0, %c0_i32 : i32, i32
  }
}

</mosaic_0001>

<llo_original>
// kernel: tpu_custom_call.1
$region0: #{tpu_custom_call.1}
  #allocation0 [shape = 'u32[]', space=smem, size = 0x4, offset = 0x4, fixed_abs, tag = 'smem constant byte address 0x4 - core index']
  #allocation1 [shape = 'u32[144,128]{1,0:T(1,128)}', space=vmem, size = 0x12000, scoped, tag = 'internal scratch']
  #allocation2 [shape = 'f32[8,128]{1,0:T(8,128)}', space=vmem, size = 0x1000, scoped, tag = 'scratch operand']
  %s0 = inlined_call_operand.hbm [shape: f32[8,8,128], index: 0, kind: input, shape index: {}]
  %s1 = inlined_call_operand.hbm [shape: f32[256,128], index: 1, kind: input, shape index: {}]
  %s2 = inlined_call_operand.hbm [shape: f32[8,128], index: 2, kind: input, shape index: {}]
  %s3 = inlined_call_operand.hbm [shape: f32[8,128], index: 3, kind: input, shape index: {}]
  %s4 = inlined_call_operand.hbm [shape: f32[8,128], index: 4, kind: input, shape index: {}]
  %s5 = inlined_call_operand.vmem [shape: f32[8,128], index: 5, kind: input, shape index: {}]
  %s6 = inlined_call_operand.hbm [shape: f32[8,128], index: 6, kind: input, shape index: {}]
  %s7 = inlined_call_operand.hbm [shape: f32[8,128], index: 7, kind: input, shape index: {}]
  %s8 = inlined_call_operand.hbm [shape: f32[8,128], index: 8, kind: input, shape index: {}]
  %s9 = inlined_call_operand.hbm [shape: f32[8,8,128], index: 9, kind: output, shape index: {0}]
  %s10 = inlined_call_operand.hbm [shape: f32[8,128], index: 10, kind: output, shape index: {1}]
  %s11 = inlined_call_operand.hbm [shape: f32[8,128], index: 11, kind: output, shape index: {2}]
  %12 = xla_tuple %s9, %s10, %s11
  %s13 = sld [smem:[#allocation0]]
  $region121: #{tpu_custom_call.1} parent=0
    _
  %s15 = ssub.s32 1, %s13
  %s16 = scalar_select 0, %s15, %s13
  $region1: #{tpu_custom_call.1} parent=0
    #allocation3 [shape = 'u8[8192]{0}', space=vmem, size = 0x2000, scoped, tag = 'input window, operand 0']
    #allocation4 [shape = 's32[2]{0}', space=sflag, size = 0x8, scoped, tag = 'scoped memory for tpu_custom_call.1']
    #allocation5 [shape = 's32[2]{0}', space=sflag, size = 0x8, scoped, tag = 'scoped memory for tpu_custom_call.1']
    #allocation6 [shape = 'u8[131072]{0}', space=vmem, size = 0x20000, scoped, tag = 'input window, operand 1, single buffered']
    #allocation7 [shape = 's32[1]{0}', space=sflag, size = 0x4, scoped, tag = 'scoped memory for tpu_custom_call.1']
    #allocation8 [shape = 'u8[4096]{0}', space=vmem, size = 0x1000, scoped, tag = 'input window, operand 2, single buffered']
    #allocation9 [shape = 'u8[4096]{0}', space=vmem, size = 0x1000, scoped, tag = 'input window, operand 3, single buffered']
    #allocation10 [shape = 's32[1]{0}', space=sflag, size = 0x4, scoped, tag = 'scoped memory for tpu_custom_call.1']
    #allocation11 [shape = 'u8[4096]{0}', space=vmem, size = 0x1000, scoped, tag = 'input window, operand 4, single buffered']
    #allocation12 [shape = 'u8[4096]{0}', space=vmem, size = 0x1000, scoped, tag = 'input window, operand 6, single buffered']
    #allocation13 [shape = 's32[1]{0}', space=sflag, size = 0x4, scoped, tag = 'scoped memory for tpu_custom_call.1']
    #allocation14 [shape = 'u8[4096]{0}', space=vmem, size = 0x1000, scoped, tag = 'input window, operand 7, single buffered']
    #allocation15 [shape = 'u8[4096]{0}', space=vmem, size = 0x1000, scoped, tag = 'input window, operand 8, single buffered']
    #allocation16 [shape = 's32[1]{0}', space=sflag, size = 0x4, scoped, tag = 'scoped memory for tpu_custom_call.1']
    #allocation17 [shape = 'u8[8192]{0}', space=vmem, size = 0x2000, scoped, tag = 'output window, operand 0']
    #allocation18 [shape = 'u8[4096]{0}', space=vmem, size = 0x1000, scoped, tag = 'output window, operand 1, single buffered']
    #allocation19 [shape = 's32[1]{0}', space=sflag, size = 0x4, scoped, tag = 'scoped memory for tpu_custom_call.1']
    #allocation20 [shape = 'u8[4096]{0}', space=vmem, size = 0x1000, scoped, tag = 'output window, operand 2, single buffered']
    %17 = vsyncpa [#allocation4], 0
    %s18 = scalar_lea.sflag [#allocation4], 1
    %19 = vsyncpa %s18, 0
    %20 = vsyncpa [#allocation7], 0
    %21 = vsyncpa [#allocation10], 0
    %22 = vsyncpa [#allocation13], 0
    %23 = vsyncpa [#allocation16], 0
    %24 = vsyncpa [#allocation5], 0
    %s25 = scalar_lea.sflag [#allocation5], 1
    %26 = vsyncpa %s25, 0
    %27 = vsyncpa [#allocation19], 0
    loop: start=0, step=1, limit=10
    $region2: #{tpu_custom_call.1} parent=1 // loop_pre_header
      _
    $region3: #{tpu_custom_call.1} parent=1 // loop_header
      %s29 = sphi 0, %s33
      %p30 = scmp.ge.s32.totalorder %s29, 10
      %s36 = sphi 0, %s48
      %s37 = sphi 0, %s44
      %s38 = sphi 0, %s36
      %s39 = sphi 0, %s37
      %s40 = sphi 0, %s38
      %s41 = sphi 0, %s39
      %s53 = sphi 0, %s55
      %s56 = sphi 0, %s53
      %s57 = sphi 0, %s56
      %s73 = sphi 0, %s57
      %s77 = sphi 0, %s77
      %s79 = sphi 0, %s77
      %s80 = sphi 0, %s79
      %s94 = sphi 0, %s80
      %s100 = sphi 0, %s102
      %s103 = sphi 0, %s100
      %s104 = sphi 0, %s103
      %s120 = sphi 0, %s104
      %s126 = sphi 0, %s128
      %s129 = sphi 0, %s126
      %s130 = sphi 0, %s129
      %s146 = sphi 0, %s130
      %s152 = sphi 0, %s154
      %s155 = sphi 0, %s152
      %s156 = sphi 0, %s155
      %s172 = sphi 0, %s156
      %s178 = sphi 0, %s180
      %s181 = sphi 0, %s178
      %s182 = sphi 0, %s181
      %s198 = sphi 0, %s182
      %s204 = sphi 0, %s206
      %s207 = sphi 0, %s204
      %s208 = sphi 0, %s207
      %s224 = sphi 0, %s208
      %s230 = sphi 0, %s232
      %s233 = sphi 0, %s230
      %s234 = sphi 0, %s233
      %s250 = sphi 0, %s234
      %s256 = sphi 0, %s258
      %s259 = sphi 0, %s256
      %s260 = sphi 0, %s259
      %s276 = sphi 0, %s260
      %s284 = sphi 0, %s286
      %s287 = sphi 0, %s284
      %s288 = sphi 0, %s287
      %s304 = sphi 0, %s288
      %s310 = sphi 0, %s312
      %s313 = sphi 0, %s310
      %s314 = sphi 0, %s313
      %s330 = sphi 0, %s314
      %s336 = sphi 0, %s338
      %s339 = sphi 0, %s336
      %s340 = sphi 0, %s339
      %s356 = sphi 0, %s340
    $region4: #{tpu_custom_call.1} parent=1 // loop_header_branch
      %32 = sbr.rel (%p30) target = $region8
    $region5: #{tpu_custom_call.1} parent=1 // loop_body
      %s34 = ssub.s32 %s29, 1
      %s35 = ssub.s32 %s29, 2
      %s42 = sadd.s32 1, %s37
      %p43 = scmp.ge.s32.totalorder %s42, 8
      %s44 = scalar_select %p43, 0, %s42
      %s45 = sadd.s32 1, %s36
      %s46 = scalar_select %p43, %s45, %s36
      %p47 = scmp.ge.s32.totalorder %s46, 1
      %s48 = scalar_select %p47, 0, %s46
      %s49 = ssub.s32 %s37, %s44
      %s50 = ssub.s32 %s36, %s48
      %s51 = sor.u32 %s49, %s50
      %p52 = scmp.eq.s32.totalorder %s51, 0
      %s54 = sadd.s32 %s53, 1
      %s55 = scalar_select %p52, %s53, %s54
      %p58 = pneg %p52
      %p59 = scmp.eq.s32.totalorder %s29, 7
      %p60 = por %p58, %p59
      %p61 = scmp.ne.s32.totalorder %s53, %s56
      %p62 = scmp.eq.s32.totalorder %s29, 0
      %p63 = por %p61, %p62
      %p64 = scmp.ne.s32.totalorder %s53, %s56
      %p65 = scmp.eq.s32.totalorder %s34, 7
      %p66 = por %p64, %p65
      %p67 = scmp.ne.s32.totalorder %s56, %s57
      %p68 = scmp.eq.s32.totalorder %s34, 0
      %p69 = por %p67, %p68
      %p70 = scmp.ne.s32.totalorder %s56, %s57
      %p71 = scmp.eq.s32.totalorder %s35, 7
      %p72 = por %p70, %p71
      %p74 = scmp.ne.s32.totalorder %s57, %s73
      %p75 = scmp.eq.s32.totalorder %s35, 0
      %p76 = por %p74, %p75
      %s78 = sadd.s32 %s77, 1
      %p81 = scmp.eq.s32.totalorder %s29, 7
      %p82 = scmp.ne.s32.totalorder %s77, %s79
      %p83 = scmp.eq.s32.totalorder %s29, 0
      %p84 = por %p82, %p83
      %p85 = scmp.ne.s32.totalorder %s77, %s79
      %p86 = scmp.eq.s32.totalorder %s34, 7
      %p87 = por %p85, %p86
      %p88 = scmp.ne.s32.totalorder %s79, %s80
      %p89 = scmp.eq.s32.totalorder %s34, 0
      %p90 = por %p88, %p89
      %p91 = scmp.ne.s32.totalorder %s79, %s80
      %p92 = scmp.eq.s32.totalorder %s35, 7
      %p93 = por %p91, %p92
      %p95 = scmp.ne.s32.totalorder %s80, %s94
      %p96 = scmp.eq.s32.totalorder %s35, 0
      %p97 = por %p95, %p96
      %s98 = ssub.s32 %s36, %s48
      %p99 = scmp.eq.s32.totalorder %s98, 0
      %s101 = sadd.s32 %s100, 1
      %s102 = scalar_select %p99, %s100, %s101
      %p105 = pneg %p99
      %p106 = scmp.eq.s32.totalorder %s29, 7
      %p107 = por %p105, %p106
      %p108 = scmp.ne.s32.totalorder %s100, %s103
      %p109 = scmp.eq.s32.totalorder %s29, 0
      %p110 = por %p108, %p109
      %p111 = scmp.ne.s32.totalorder %s100, %s103
      %p112 = scmp.eq.s32.totalorder %s34, 7
      %p113 = por %p111, %p112
      %p114 = scmp.ne.s32.totalorder %s103, %s104
      %p115 = scmp.eq.s32.totalorder %s34, 0
      %p116 = por %p114, %p115
      %p117 = scmp.ne.s32.totalorder %s103, %s104
      %p118 = scmp.eq.s32.totalorder %s35, 7
      %p119 = por %p117, %p118
      %p121 = scmp.ne.s32.totalorder %s104, %s120
      %p122 = scmp.eq.s32.totalorder %s35, 0
      %p123 = por %p121, %p122
      %s124 = ssub.s32 %s36, %s48
      %p125 = scmp.eq.s32.totalorder %s124, 0
      %s127 = sadd.s32 %s126, 1
      %s128 = scalar_select %p125, %s126, %s127
      %p131 = pneg %p125
      %p132 = scmp.eq.s32.totalorder %s29, 7
      %p133 = por %p131, %p132
      %p134 = scmp.ne.s32.totalorder %s126, %s129
      %p135 = scmp.eq.s32.totalorder %s29, 0
      %p136 = por %p134, %p135
      %p137 = scmp.ne.s32.totalorder %s126, %s129
      %p138 = scmp.eq.s32.totalorder %s34, 7
      %p139 = por %p137, %p138
      %p140 = scmp.ne.s32.totalorder %s129, %s130
      %p141 = scmp.eq.s32.totalorder %s34, 0
      %p142 = por %p140, %p141
      %p143 = scmp.ne.s32.totalorder %s129, %s130
      %p144 = scmp.eq.s32.totalorder %s35, 7
      %p145 = por %p143, %p144
      %p147 = scmp.ne.s32.totalorder %s130, %s146
      %p148 = scmp.eq.s32.totalorder %s35, 0
      %p149 = por %p147, %p148
      %s150 = ssub.s32 %s36, %s48
      %p151 = scmp.eq.s32.totalorder %s150, 0
      %s153 = sadd.s32 %s152, 1
      %s154 = scalar_select %p151, %s152, %s153
      %p157 = pneg %p151
      %p158 = scmp.eq.s32.totalorder %s29, 7
      %p159 = por %p157, %p158
      %p160 = scmp.ne.s32.totalorder %s152, %s155
      %p161 = scmp.eq.s32.totalorder %s29, 0
      %p162 = por %p160, %p161
      %p163 = scmp.ne.s32.totalorder %s152, %s155
      %p164 = scmp.eq.s32.totalorder %s34, 7
      %p165 = por %p163, %p164
      %p166 = scmp.ne.s32.totalorder %s155, %s156
      %p167 = scmp.eq.s32.totalorder %s34, 0
      %p168 = por %p166, %p167
      %p169 = scmp.ne.s32.totalorder %s155, %s156
      %p170 = scmp.eq.s32.totalorder %s35, 7
      %p171 = por %p169, %p170
      %p173 = scmp.ne.s32.totalorder %s156, %s172
      %p174 = scmp.eq.s32.totalorder %s35, 0
      %p175 = por %p173, %p174
      %s176 = ssub.s32 %s36, %s48
      %p177 = scmp.eq.s32.totalorder %s176, 0
      %s179 = sadd.s32 %s178, 1
      %s180 = scalar_select %p177, %s178, %s179
      %p183 = pneg %p177
      %p184 = scmp.eq.s32.totalorder %s29, 7
      %p185 = por %p183, %p184
      %p186 = scmp.ne.s32.totalorder %s178, %s181
      %p187 = scmp.eq.s32.totalorder %s29, 0
      %p188 = por %p186, %p187
      %p189 = scmp.ne.s32.totalorder %s178, %s181
      %p190 = scmp.eq.s32.totalorder %s34, 7
      %p191 = por %p189, %p190
      %p192 = scmp.ne.s32.totalorder %s181, %s182
      %p193 = scmp.eq.s32.totalorder %s34, 0
      %p194 = por %p192, %p193
      %p195 = scmp.ne.s32.totalorder %s181, %s182
      %p196 = scmp.eq.s32.totalorder %s35, 7
      %p197 = por %p195, %p196
      %p199 = scmp.ne.s32.totalorder %s182, %s198
      %p200 = scmp.eq.s32.totalorder %s35, 0
      %p201 = por %p199, %p200
      %s202 = ssub.s32 %s36, %s48
      %p203 = scmp.eq.s32.totalorder %s202, 0
      %s205 = sadd.s32 %s204, 1
      %s206 = scalar_select %p203, %s204, %s205
      %p209 = pneg %p203
      %p210 = scmp.eq.s32.totalorder %s29, 7
      %p211 = por %p209, %p210
      %p212 = scmp.ne.s32.totalorder %s204, %s207
      %p213 = scmp.eq.s32.totalorder %s29, 0
      %p214 = por %p212, %p213
      %p215 = scmp.ne.s32.totalorder %s204, %s207
      %p216 = scmp.eq.s32.totalorder %s34, 7
      %p217 = por %p215, %p216
      %p218 = scmp.ne.s32.totalorder %s207, %s208
      %p219 = scmp.eq.s32.totalorder %s34, 0
      %p220 = por %p218, %p219
      %p221 = scmp.ne.s32.totalorder %s207, %s208
      %p222 = scmp.eq.s32.totalorder %s35, 7
      %p223 = por %p221, %p222
      %p225 = scmp.ne.s32.totalorder %s208, %s224
      %p226 = scmp.eq.s32.totalorder %s35, 0
      %p227 = por %p225, %p226
      %s228 = ssub.s32 %s36, %s48
      %p229 = scmp.eq.s32.totalorder %s228, 0
      %s231 = sadd.s32 %s230, 1
      %s232 = scalar_select %p229, %s230, %s231
      %p235 = pneg %p229
      %p236 = scmp.eq.s32.totalorder %s29, 7
      %p237 = por %p235, %p236
      %p238 = scmp.ne.s32.totalorder %s230, %s233
      %p239 = scmp.eq.s32.totalorder %s29, 0
      %p240 = por %p238, %p239
      %p241 = scmp.ne.s32.totalorder %s230, %s233
      %p242 = scmp.eq.s32.totalorder %s34, 7
      %p243 = por %p241, %p242
      %p244 = scmp.ne.s32.totalorder %s233, %s234
      %p245 = scmp.eq.s32.totalorder %s34, 0
      %p246 = por %p244, %p245
      %p247 = scmp.ne.s32.totalorder %s233, %s234
      %p248 = scmp.eq.s32.totalorder %s35, 7
      %p249 = por %p247, %p248
      %p251 = scmp.ne.s32.totalorder %s234, %s250
      %p252 = scmp.eq.s32.totalorder %s35, 0
      %p253 = por %p251, %p252
      %s254 = ssub.s32 %s36, %s48
      %p255 = scmp.eq.s32.totalorder %s254, 0
      %s257 = sadd.s32 %s256, 1
      %s258 = scalar_select %p255, %s256, %s257
      %p261 = pneg %p255
      %p262 = scmp.eq.s32.totalorder %s29, 7
      %p263 = por %p261, %p262
      %p264 = scmp.ne.s32.totalorder %s256, %s259
      %p265 = scmp.eq.s32.totalorder %s29, 0
      %p266 = por %p264, %p265
      %p267 = scmp.ne.s32.totalorder %s256, %s259
      %p268 = scmp.eq.s32.totalorder %s34, 7
      %p269 = por %p267, %p268
      %p270 = scmp.ne.s32.totalorder %s259, %s260
      %p271 = scmp.eq.s32.totalorder %s34, 0
      %p272 = por %p270, %p271
      %p273 = scmp.ne.s32.totalorder %s259, %s260
      %p274 = scmp.eq.s32.totalorder %s35, 7
      %p275 = por %p273, %p274
      %p277 = scmp.ne.s32.totalorder %s260, %s276
      %p278 = scmp.eq.s32.totalorder %s35, 0
      %p279 = por %p277, %p278
      %s280 = ssub.s32 %s37, %s44
      %s281 = ssub.s32 %s36, %s48
      %s282 = sor.u32 %s280, %s281
      %p283 = scmp.eq.s32.totalorder %s282, 0
      %s285 = sadd.s32 %s284, 1
      %s286 = scalar_select %p283, %s284, %s285
      %p289 = pneg %p283
      %p290 = scmp.eq.s32.totalorder %s29, 7
      %p291 = por %p289, %p290
      %p292 = scmp.ne.s32.totalorder %s284, %s287
      %p293 = scmp.eq.s32.totalorder %s29, 0
      %p294 = por %p292, %p293
      %p295 = scmp.ne.s32.totalorder %s284, %s287
      %p296 = scmp.eq.s32.totalorder %s34, 7
      %p297 = por %p295, %p296
      %p298 = scmp.ne.s32.totalorder %s287, %s288
      %p299 = scmp.eq.s32.totalorder %s34, 0
      %p300 = por %p298, %p299
      %p301 = scmp.ne.s32.totalorder %s287, %s288
      %p302 = scmp.eq.s32.totalorder %s35, 7
      %p303 = por %p301, %p302
      %p305 = scmp.ne.s32.totalorder %s288, %s304
      %p306 = scmp.eq.s32.totalorder %s35, 0
      %p307 = por %p305, %p306
      %s308 = ssub.s32 %s36, %s48
      %p309 = scmp.eq.s32.totalorder %s308, 0
      %s311 = sadd.s32 %s310, 1
      %s312 = scalar_select %p309, %s310, %s311
      %p315 = pneg %p309
      %p316 = scmp.eq.s32.totalorder %s29, 7
      %p317 = por %p315, %p316
      %p318 = scmp.ne.s32.totalorder %s310, %s313
      %p319 = scmp.eq.s32.totalorder %s29, 0
      %p320 = por %p318, %p319
      %p321 = scmp.ne.s32.totalorder %s310, %s313
      %p322 = scmp.eq.s32.totalorder %s34, 7
      %p323 = por %p321, %p322
      %p324 = scmp.ne.s32.totalorder %s313, %s314
      %p325 = scmp.eq.s32.totalorder %s34, 0
      %p326 = por %p324, %p325
      %p327 = scmp.ne.s32.totalorder %s313, %s314
      %p328 = scmp.eq.s32.totalorder %s35, 7
      %p329 = por %p327, %p328
      %p331 = scmp.ne.s32.totalorder %s314, %s330
      %p332 = scmp.eq.s32.totalorder %s35, 0
      %p333 = por %p331, %p332
      %s334 = ssub.s32 %s36, %s48
      %p335 = scmp.eq.s32.totalorder %s334, 0
      %s337 = sadd.s32 %s336, 1
      %s338 = scalar_select %p335, %s336, %s337
      %p341 = pneg %p335
      %p342 = scmp.eq.s32.totalorder %s29, 7
      %p343 = por %p341, %p342
      %p344 = scmp.ne.s32.totalorder %s336, %s339
      %p345 = scmp.eq.s32.totalorder %s29, 0
      %p346 = por %p344, %p345
      %p347 = scmp.ne.s32.totalorder %s336, %s339
      %p348 = scmp.eq.s32.totalorder %s34, 7
      %p349 = por %p347, %p348
      %p350 = scmp.ne.s32.totalorder %s339, %s340
      %p351 = scmp.eq.s32.totalorder %s34, 0
      %p352 = por %p350, %p351
      %p353 = scmp.ne.s32.totalorder %s339, %s340
      %p354 = scmp.eq.s32.totalorder %s35, 7
      %p355 = por %p353, %p354
      %p357 = scmp.ne.s32.totalorder %s340, %s356
      %p358 = scmp.eq.s32.totalorder %s35, 0
      %p359 = por %p357, %p358
      %p360 = scmp.le.s32.totalorder 1, %s29
      %p361 = scmp.lt.s32.totalorder %s29, 9
      %p362 = pnand %p360, %p361
      %p363 = pneg %p362
      // Predicated region
      $region9: #{tpu_custom_call.1} parent=5 // pred_check
        _
      $region10: #{tpu_custom_call.1} parent=5 // pred_check_branch
        %365 = sbr.rel (%p362) target = $region12
      $region11: #{tpu_custom_call.1} parent=5 // pred_region
        %s366 = ssub.s32 %s29, 1
        // Predicated region
        $region13: #{tpu_custom_call.1} parent=11 // pred_check
          %p367 = pneg %p90
        $region14: #{tpu_custom_call.1} parent=11 // pred_check_branch
          %369 = sbr.rel (%p367) target = $region16
        $region15: #{tpu_custom_call.1} parent=11 // pred_region
          %s371 = ssub.s32 4096, 4096
          %372 = vsyncadd [#allocation7], %s371
          %s373 = sshll.u32 [#allocation6], 4
          %s374 = int_to_ptr.vmem [resolvable:$true] %s373
          %379 = dma.hbm_to_vmem [thread:$0]  %s1, 4096, %s374, [#allocation7], 128, 128, 8
        $region16: #{tpu_custom_call.1} parent=11 // pred_fallthru
          _
        // Predicated region
        $region17: #{tpu_custom_call.1} parent=11 // pred_check
          %p380 = pneg %p116
        $region18: #{tpu_custom_call.1} parent=11 // pred_check_branch
          %382 = sbr.rel (%p380) target = $region20
        $region19: #{tpu_custom_call.1} parent=11 // pred_region
          %s384 = ssub.s32 128, 128
          %385 = vsyncadd [#allocation7], %s384
          %s386 = smul.addr %s38, 128
          %s387 = scalar_lea.hbm %s2, %s386
          %s389 = sshll.u32 [#allocation8], 4
          %s390 = int_to_ptr.vmem [resolvable:$true] %s389
          %392 = dma.hbm_to_vmem [thread:$0]  %s387, 128, %s390, [#allocation7]
        $region20: #{tpu_custom_call.1} parent=11 // pred_fallthru
          _
        // Predicated region
        $region21: #{tpu_custom_call.1} parent=11 // pred_check
          %p393 = pneg %p142
        $region22: #{tpu_custom_call.1} parent=11 // pred_check_branch
          %395 = sbr.rel (%p393) target = $region24
        $region23: #{tpu_custom_call.1} parent=11 // pred_region
          %s397 = ssub.s32 128, 128
          %398 = vsyncadd [#allocation10], %s397
          %s399 = smul.addr %s38, 128
          %s400 = scalar_lea.hbm %s3, %s399
          %s402 = sshll.u32 [#allocation9], 4
          %s403 = int_to_ptr.vmem [resolvable:$true] %s402
          %405 = dma.hbm_to_vmem [thread:$0]  %s400, 128, %s403, [#allocation10]
        $region24: #{tpu_custom_call.1} parent=11 // pred_fallthru
          _
        // Predicated region
        $region25: #{tpu_custom_call.1} parent=11 // pred_check
          %p406 = pneg %p168
        $region26: #{tpu_custom_call.1} parent=11 // pred_check_branch
          %408 = sbr.rel (%p406) target = $region28
        $region27: #{tpu_custom_call.1} parent=11 // pred_region
          %s410 = ssub.s32 128, 128
          %411 = vsyncadd [#allocation10], %s410
          %s412 = smul.addr %s38, 128
          %s413 = scalar_lea.hbm %s4, %s412
          %s415 = sshll.u32 [#allocation11], 4
          %s416 = int_to_ptr.vmem [resolvable:$true] %s415
          %418 = dma.hbm_to_vmem [thread:$0]  %s413, 128, %s416, [#allocation10]
        $region28: #{tpu_custom_call.1} parent=11 // pred_fallthru
          _
        // Predicated region
        $region29: #{tpu_custom_call.1} parent=11 // pred_check
          %p419 = pneg %p194
        $region30: #{tpu_custom_call.1} parent=11 // pred_check_branch
          %421 = sbr.rel (%p419) target = $region32
        $region31: #{tpu_custom_call.1} parent=11 // pred_region
          %p422 = scmp.lt.s32.totalorder %s38, 0
          %s423 = scalar_select %p422, %s38, 0
          %s424 = smul.addr %s423, 8
          %s425 = scalar_lea.vmem %s5, %s424
        $region32: #{tpu_custom_call.1} parent=11 // pred_fallthru
          _
        // Predicated region
        $region33: #{tpu_custom_call.1} parent=11 // pred_check
          %p426 = pneg %p220
        $region34: #{tpu_custom_call.1} parent=11 // pred_check_branch
          %428 = sbr.rel (%p426) target = $region36
        $region35: #{tpu_custom_call.1} parent=11 // pred_region
          %s430 = ssub.s32 128, 128
          %431 = vsyncadd [#allocation13], %s430
          %s432 = smul.addr %s38, 128
          %s433 = scalar_lea.hbm %s6, %s432
          %s435 = sshll.u32 [#allocation12], 4
          %s436 = int_to_ptr.vmem [resolvable:$true] %s435
          %438 = dma.hbm_to_vmem [thread:$0]  %s433, 128, %s436, [#allocation13]
        $region36: #{tpu_custom_call.1} parent=11 // pred_fallthru
          _
        // Predicated region
        $region37: #{tpu_custom_call.1} parent=11 // pred_check
          %p439 = pneg %p246
        $region38: #{tpu_custom_call.1} parent=11 // pred_check_branch
          %441 = sbr.rel (%p439) target = $region40
        $region39: #{tpu_custom_call.1} parent=11 // pred_region
          %s443 = ssub.s32 128, 128
          %444 = vsyncadd [#allocation13], %s443
          %s445 = smul.addr %s38, 128
          %s446 = scalar_lea.hbm %s7, %s445
          %s448 = sshll.u32 [#allocation14], 4
          %s449 = int_to_ptr.vmem [resolvable:$true] %s448
          %451 = dma.hbm_to_vmem [thread:$0]  %s446, 128, %s449, [#allocation13]
        $region40: #{tpu_custom_call.1} parent=11 // pred_fallthru
          _
        // Predicated region
        $region41: #{tpu_custom_call.1} parent=11 // pred_check
          %p452 = pneg %p272
        $region42: #{tpu_custom_call.1} parent=11 // pred_check_branch
          %454 = sbr.rel (%p452) target = $region44
        $region43: #{tpu_custom_call.1} parent=11 // pred_region
          %s456 = ssub.s32 128, 128
          %457 = vsyncadd [#allocation16], %s456
          %s458 = smul.addr %s38, 128
          %s459 = scalar_lea.hbm %s8, %s458
          %s461 = sshll.u32 [#allocation15], 4
          %s462 = int_to_ptr.vmem [resolvable:$true] %s461
          %464 = dma.hbm_to_vmem [thread:$0]  %s459, 128, %s462, [#allocation16]
        $region44: #{tpu_custom_call.1} parent=11 // pred_fallthru
          _
      $region12: #{tpu_custom_call.1} parent=5 // pred_fallthru
        _
      %p465 = scmp.lt.s32.totalorder %s29, 8
      // Predicated region
      $region45: #{tpu_custom_call.1} parent=5 // pred_check
        %p466 = pneg %p465
      $region46: #{tpu_custom_call.1} parent=5 // pred_check_branch
        %468 = sbr.rel (%p466) target = $region48
      $region47: #{tpu_custom_call.1} parent=5 // pred_region
        // Predicated region
        $region49: #{tpu_custom_call.1} parent=47 // pred_check
          %p469 = pneg %p63
        $region50: #{tpu_custom_call.1} parent=47 // pred_check_branch
          %471 = sbr.rel (%p469) target = $region52
        $region51: #{tpu_custom_call.1} parent=47 // pred_region
          %s472 = sand.u32 %s53, 1
          %s473 = scalar_lea.sflag [#allocation4], %s472
          %s474 = sand.u32 %s53, 1
          %s475 = smul.addr %s474, 8
          %s476 = scalar_lea.vmem [#allocation3], %s475
          %s478 = ssub.s32 128, 128
          %479 = vsyncadd %s473, %s478
          %s480 = sadd.s32 %s36, %s37
          %s481 = smul.addr %s480, 128
          %s482 = scalar_lea.hbm %s0, %s481
          %s484 = sshll.u32 %s476, 4
          %s485 = int_to_ptr.vmem [resolvable:$true] %s484
          %487 = dma.hbm_to_vmem [thread:$0]  %s482, 128, %s485, %s473
        $region52: #{tpu_custom_call.1} parent=47 // pred_fallthru
          _
      $region48: #{tpu_custom_call.1} parent=5 // pred_fallthru
        _
      %p488 = scmp.le.s32.totalorder 1, %s29
      %p489 = scmp.lt.s32.totalorder %s29, 9
      %p490 = pnand %p488, %p489
      %p491 = pneg %p490
      // Predicated region
      $region53: #{tpu_custom_call.1} parent=5 // pred_check
        _
      $region54: #{tpu_custom_call.1} parent=5 // pred_check_branch
        %493 = sbr.rel (%p490) target = $region56
      $region55: #{tpu_custom_call.1} parent=5 // pred_region
        %s494 = ssub.s32 %s29, 1
        %s495 = sand.u32 %s56, 1
        %s496 = scalar_lea.sflag [#allocation4], %s495
        %s497 = sand.u32 %s56, 1
        %s498 = smul.addr %s497, 8
        %s499 = scalar_lea.vmem [#allocation3], %s498
        // Predicated region
        $region57: #{tpu_custom_call.1} parent=55 // pred_check
          %p500 = pneg %p69
        $region58: #{tpu_custom_call.1} parent=55 // pred_check_branch
          %502 = sbr.rel (%p500) target = $region60
        $region59: #{tpu_custom_call.1} parent=55 // pred_region
          %503 = dma.done %s496, 128
        $region60: #{tpu_custom_call.1} parent=55 // pred_fallthru
          _
        // Predicated region
        $region61: #{tpu_custom_call.1} parent=55 // pred_check
          %p504 = pneg %p90
        $region62: #{tpu_custom_call.1} parent=55 // pred_check_branch
          %506 = sbr.rel (%p504) target = $region64
        $region63: #{tpu_custom_call.1} parent=55 // pred_region
          %507 = dma.done [#allocation7], 4096
        $region64: #{tpu_custom_call.1} parent=55 // pred_fallthru
          _
        // Predicated region
        $region65: #{tpu_custom_call.1} parent=55 // pred_check
          %p508 = pneg %p116
        $region66: #{tpu_custom_call.1} parent=55 // pred_check_branch
          %510 = sbr.rel (%p508) target = $region68
        $region67: #{tpu_custom_call.1} parent=55 // pred_region
          %511 = dma.done [#allocation7], 128
        $region68: #{tpu_custom_call.1} parent=55 // pred_fallthru
          _
        // Predicated region
        $region69: #{tpu_custom_call.1} parent=55 // pred_check
          %p512 = pneg %p142
        $region70: #{tpu_custom_call.1} parent=55 // pred_check_branch
          %514 = sbr.rel (%p512) target = $region72
        $region71: #{tpu_custom_call.1} parent=55 // pred_region
          %515 = dma.done [#allocation10], 128
        $region72: #{tpu_custom_call.1} parent=55 // pred_fallthru
          _
        // Predicated region
        $region73: #{tpu_custom_call.1} parent=55 // pred_check
          %p516 = pneg %p168
        $region74: #{tpu_custom_call.1} parent=55 // pred_check_branch
          %518 = sbr.rel (%p516) target = $region76
        $region75: #{tpu_custom_call.1} parent=55 // pred_region
          %519 = dma.done [#allocation10], 128
        $region76: #{tpu_custom_call.1} parent=55 // pred_fallthru
          _
        // Predicated region
        $region77: #{tpu_custom_call.1} parent=55 // pred_check
          %p520 = pneg %p220
        $region78: #{tpu_custom_call.1} parent=55 // pred_check_branch
          %522 = sbr.rel (%p520) target = $region80
        $region79: #{tpu_custom_call.1} parent=55 // pred_region
          %523 = dma.done [#allocation13], 128
        $region80: #{tpu_custom_call.1} parent=55 // pred_fallthru
          _
        // Predicated region
        $region81: #{tpu_custom_call.1} parent=55 // pred_check
          %p524 = pneg %p246
        $region82: #{tpu_custom_call.1} parent=55 // pred_check_branch
          %526 = sbr.rel (%p524) target = $region84
        $region83: #{tpu_custom_call.1} parent=55 // pred_region
          %527 = dma.done [#allocation13], 128
        $region84: #{tpu_custom_call.1} parent=55 // pred_fallthru
          _
        // Predicated region
        $region85: #{tpu_custom_call.1} parent=55 // pred_check
          %p528 = pneg %p272
        $region86: #{tpu_custom_call.1} parent=55 // pred_check_branch
          %530 = sbr.rel (%p528) target = $region88
        $region87: #{tpu_custom_call.1} parent=55 // pred_region
          %531 = dma.done [#allocation16], 128
        $region88: #{tpu_custom_call.1} parent=55 // pred_fallthru
          _
        %s532 = sand.u32 %s56, 1
        %s533 = scalar_lea.sflag [#allocation4], %s532
        %s534 = sand.u32 %s56, 1
        %s535 = smul.addr %s534, 8
        %s536 = scalar_lea.vmem [#allocation3], %s535
        %p537 = pneg %p69
        %p538 = pneg %p66
        %p539 = pneg %p90
        %p540 = pneg %p87
        %p541 = pneg %p116
        %p542 = pneg %p113
        %p543 = pneg %p142
        %p544 = pneg %p139
        %p545 = pneg %p168
        %p546 = pneg %p165
        %p547 = scmp.lt.s32.totalorder %s38, 0
        %s548 = scalar_select %p547, %s38, 0
        %s549 = smul.addr %s548, 8
        %s550 = scalar_lea.vmem %s5, %s549
        %p551 = pneg %p194
        %p552 = pneg %p191
        %p553 = pneg %p220
        %p554 = pneg %p217
        %p555 = pneg %p246
        %p556 = pneg %p243
        %p557 = pneg %p272
        %p558 = pneg %p269
        %p559 = pneg %p300
        %p560 = pneg %p297
        %s561 = sand.u32 %s287, 1
        %s562 = scalar_lea.sflag [#allocation5], %s561
        %s563 = sand.u32 %s287, 1
        %s564 = smul.addr %s563, 8
        %s565 = scalar_lea.vmem [#allocation17], %s564
        %p566 = pneg %p326
        %p567 = pneg %p323
        %p568 = pneg %p352
        %p569 = pneg %p349
        %p570 = scmp.lt.s32.totalorder %s38, 0
        %s571 = scalar_select %p570, %s38, 0
        %s572 = smul.addr %s571, 8
        %s573 = scalar_lea.vmem %s5, %s572
        %p574 = scmp.eq.s32.totalorder %s39, 0
        // Predicated region
        $region89: #{tpu_custom_call.1} parent=55 // pred_check
          %p575 = pneg %p574
        $region90: #{tpu_custom_call.1} parent=55 // pred_check_branch
          %577 = sbr.rel (%p575) target = $region92
        $region91: #{tpu_custom_call.1} parent=55 // pred_region
          %v578 = vld [vmem:[#allocation12] sm:$0xff]
          %579 = vst [vmem:[#allocation18] sm:$0xff] %v578
          %v580 = vld [vmem:[#allocation14] sm:$0xff]
          %581 = vst [vmem:[#allocation20] sm:$0xff] %v580
          %v582 = vld [vmem:[#allocation15] sm:$0xff]
          %583 = vst [vmem:[#allocation2] sm:$0xff] %v582
        $region92: #{tpu_custom_call.1} parent=55 // pred_fallthru
          _
        %v584 = vld [vmem:[%s499] sm:$0xff]
        %v585 = vld [vmem:[#allocation2] sm:$0xff]
        %v586 = vld [vmem:[#allocation6] sm:$0xff]
        %v587 = vld [vmem:[#allocation6 + $0x8] sm:$0xff]
        %v588 = vld [vmem:[#allocation6 + $0x10] sm:$0xff]
        %v589 = vld [vmem:[#allocation6 + $0x18] sm:$0xff]
        %v590 = vld [vmem:[#allocation6 + $0x20] sm:$0xff]
        %v591 = vld [vmem:[#allocation6 + $0x28] sm:$0xff]
        %v592 = vld [vmem:[#allocation6 + $0x30] sm:$0xff]
        %v593 = vld [vmem:[#allocation6 + $0x38] sm:$0xff]
        %v594 = vld [vmem:[#allocation6 + $0x40] sm:$0xff]
        %v595 = vld [vmem:[#allocation6 + $0x48] sm:$0xff]
        %v596 = vld [vmem:[#allocation6 + $0x50] sm:$0xff]
        %v597 = vld [vmem:[#allocation6 + $0x58] sm:$0xff]
        %v598 = vld [vmem:[#allocation6 + $0x60] sm:$0xff]
        %v599 = vld [vmem:[#allocation6 + $0x68] sm:$0xff]
        %v600 = vld [vmem:[#allocation6 + $0x70] sm:$0xff]
        %v601 = vld [vmem:[#allocation6 + $0x78] sm:$0xff]
        %v602 = vld [vmem:[#allocation6 + $0x80] sm:$0xff]
        %v603 = vld [vmem:[#allocation6 + $0x88] sm:$0xff]
        %v604 = vld [vmem:[#allocation6 + $0x90] sm:$0xff]
        %v605 = vld [vmem:[#allocation6 + $0x98] sm:$0xff]
        %v606 = vld [vmem:[#allocation6 + $0xa0] sm:$0xff]
        %v607 = vld [vmem:[#allocation6 + $0xa8] sm:$0xff]
        %v608 = vld [vmem:[#allocation6 + $0xb0] sm:$0xff]
        %v609 = vld [vmem:[#allocation6 + $0xb8] sm:$0xff]
        %v610 = vld [vmem:[#allocation6 + $0xc0] sm:$0xff]
        %v611 = vld [vmem:[#allocation6 + $0xc8] sm:$0xff]
        %v612 = vld [vmem:[#allocation6 + $0xd0] sm:$0xff]
        %v613 = vld [vmem:[#allocation6 + $0xd8] sm:$0xff]
        %v614 = vld [vmem:[#allocation6 + $0xe0] sm:$0xff]
        %v615 = vld [vmem:[#allocation6 + $0xe8] sm:$0xff]
        %v616 = vld [vmem:[#allocation6 + $0xf0] sm:$0xff]
        %v617 = vld [vmem:[#allocation6 + $0xf8] sm:$0xff]
        %v618 = vld [vmem:[#allocation8] sm:$0xff]
        %619 = vmatprep.subr.mxu0 0.0
        %620 = vmatpush1.msra.mxu0 %v601
        %621 = vmatprep.subr.mxu0 0.0
        %622 = vmatpush1.msra.mxu0 %v600
        %623 = vmatprep.subr.mxu0 0.0
        %624 = vmatpush1.msra.mxu0 %v599
        %625 = vmatprep.subr.mxu0 0.0
        %626 = vmatpush1.msra.mxu0 %v598
        %627 = vmatprep.subr.mxu0 0.0
        %628 = vmatpush1.msra.mxu0 %v597
        %629 = vmatprep.subr.mxu0 0.0
        %630 = vmatpush1.msra.mxu0 %v596
        %631 = vmatprep.subr.mxu0 0.0
        %632 = vmatpush1.msra.mxu0 %v595
        %633 = vmatprep.subr.mxu0 0.0
        %634 = vmatpush1.msra.mxu0 %v594
        %635 = vmatprep.subr.mxu0 0.0
        %636 = vmatpush1.msra.mxu0 %v593
        %637 = vmatprep.subr.mxu0 0.0
        %638 = vmatpush1.msra.mxu0 %v592
        %639 = vmatprep.subr.mxu0 0.0
        %640 = vmatpush1.msra.mxu0 %v591
        %641 = vmatprep.subr.mxu0 0.0
        %642 = vmatpush1.msra.mxu0 %v590
        %643 = vmatprep.subr.mxu0 0.0
        %644 = vmatpush1.msra.mxu0 %v589
        %645 = vmatprep.subr.mxu0 0.0
        %646 = vmatpush1.msra.mxu0 %v588
        %647 = vmatprep.subr.mxu0 0.0
        %648 = vmatpush1.msra.mxu0 %v587
        %649 = vmatprep.subr.mxu0 0.0
        %650 = vmatpush1.msra.mxu0 %v586
        %651 = vmatprep.subr.mxu0 0.0
        %652 = vmatpush2.msra.mxu0 %v617
        %653 = vmatprep.subr.mxu0 0.0
        %654 = vmatpush2.msra.mxu0 %v616
        %655 = vmatprep.subr.mxu0 0.0
        %656 = vmatpush2.msra.mxu0 %v615
        %657 = vmatprep.subr.mxu0 0.0
        %658 = vmatpush2.msra.mxu0 %v614
        %659 = vmatprep.subr.mxu0 0.0
        %660 = vmatpush2.msra.mxu0 %v613
        %661 = vmatprep.subr.mxu0 0.0
        %662 = vmatpush2.msra.mxu0 %v612
        %663 = vmatprep.subr.mxu0 0.0
        %664 = vmatpush2.msra.mxu0 %v611
        %665 = vmatprep.subr.mxu0 0.0
        %666 = vmatpush2.msra.mxu0 %v610
        %667 = vmatprep.subr.mxu0 0.0
        %668 = vmatpush2.msra.mxu0 %v609
        %669 = vmatprep.subr.mxu0 0.0
        %670 = vmatpush2.msra.mxu0 %v608
        %671 = vmatprep.subr.mxu0 0.0
        %672 = vmatpush2.msra.mxu0 %v607
        %673 = vmatprep.subr.mxu0 0.0
        %674 = vmatpush2.msra.mxu0 %v606
        %675 = vmatprep.subr.mxu0 0.0
        %676 = vmatpush2.msra.mxu0 %v605
        %677 = vmatprep.subr.mxu0 0.0
        %678 = vmatpush2.msra.mxu0 %v604
        %679 = vmatprep.subr.mxu0 0.0
        %680 = vmatpush2.msra.mxu0 %v603
        %681 = vmatprep.subr.mxu0 0.0
        %682 = vmatpush2.msra.mxu0 %v602
        %683 = vmatprep.mubr.f32.mxu0 %v585
        %684 = vmatmul.mubr.f32.gmra.mxu0 %v584
        %v685 = vpop.f32.mrf.mxu0
        %v686 = vadd.f32 %v618, %v685
        %v687 = vpop.f32.mrf.mxu0
        %688 = vdwg.mxu0
        %v689 = vld [vmem:[#allocation9] sm:$0xff]
        %v690 = vld [vmem:[#allocation18] sm:$0xff]
        %v691 = vmul.f32 %v689, %v690
        %v692 = vadd.f32 %v691, %v686
        %v693 = vld [vmem:[#allocation11] sm:$0xff]
        %v694 = vld [vmem:[#allocation20] sm:$0xff]
        %v695 = vmul.f32 %v693, %v694
        %v696 = vsub.f32 1.0, %v585
        %v697 = vmul.f32 %v695, %v696
        %v698 = vadd.f32 %v697, %v692
        %v699 = vld [vmem:[%s573] sm:$0xff]
        %vm700 = vcmp.ge.f32.partialorder %v698, %v699
        %v701 = vsel %vm700, 1, 0
        %v702 = vcvt.s32.f32 %v701
        %703 = vst [vmem:[#allocation18] sm:$0xff] %v692
        %704 = vst [vmem:[#allocation20] sm:$0xff] %v698
        %705 = vst [vmem:[#allocation2] sm:$0xff] %v702
        %706 = vst [vmem:[%s565] sm:$0xff] %v702
        %s707 = sand.u32 %s287, 1
        %s708 = scalar_lea.sflag [#allocation5], %s707
        %s709 = sand.u32 %s287, 1
        %s710 = smul.addr %s709, 8
        %s711 = scalar_lea.vmem [#allocation17], %s710
        // Predicated region
        $region93: #{tpu_custom_call.1} parent=55 // pred_check
          %p712 = pneg %p297
        $region94: #{tpu_custom_call.1} parent=55 // pred_check_branch
          %714 = sbr.rel (%p712) target = $region96
        $region95: #{tpu_custom_call.1} parent=55 // pred_region
          %s716 = ssub.s32 128, 128
          %717 = vsyncadd %s708, %s716
          %s718 = sadd.s32 %s38, %s39
          %s719 = smul.addr %s718, 128
          %s720 = scalar_lea.hbm %s9, %s719
          %s722 = sshll.u32 %s711, 4
          %s723 = int_to_ptr.vmem [resolvable:$true] %s722
          %725 = dma.vmem_to_hbm [thread:$0]  %s723, 128, %s720, %s708
        $region96: #{tpu_custom_call.1} parent=55 // pred_fallthru
          _
        // Predicated region
        $region97: #{tpu_custom_call.1} parent=55 // pred_check
          %p726 = pneg %p323
        $region98: #{tpu_custom_call.1} parent=55 // pred_check_branch
          %728 = sbr.rel (%p726) target = $region100
        $region99: #{tpu_custom_call.1} parent=55 // pred_region
          %s730 = ssub.s32 128, 128
          %731 = vsyncadd [#allocation19], %s730
          %s732 = smul.addr %s38, 128
          %s733 = scalar_lea.hbm %s10, %s732
          %s735 = sshll.u32 [#allocation18], 4
          %s736 = int_to_ptr.vmem [resolvable:$true] %s735
          %738 = dma.vmem_to_hbm [thread:$0]  %s736, 128, %s733, [#allocation19]
        $region100: #{tpu_custom_call.1} parent=55 // pred_fallthru
          _
        // Predicated region
        $region101: #{tpu_custom_call.1} parent=55 // pred_check
          %p739 = pneg %p349
        $region102: #{tpu_custom_call.1} parent=55 // pred_check_branch
          %741 = sbr.rel (%p739) target = $region104
        $region103: #{tpu_custom_call.1} parent=55 // pred_region
          %s743 = ssub.s32 128, 128
          %744 = vsyncadd [#allocation19], %s743
          %s745 = smul.addr %s38, 128
          %s746 = scalar_lea.hbm %s11, %s745
          %s748 = sshll.u32 [#allocation20], 4
          %s749 = int_to_ptr.vmem [resolvable:$true] %s748
          %751 = dma.vmem_to_hbm [thread:$0]  %s749, 128, %s746, [#allocation19]
        $region104: #{tpu_custom_call.1} parent=55 // pred_fallthru
          _
        // Predicated region
        $region105: #{tpu_custom_call.1} parent=55 // pred_check
          %p752 = pneg %p323
        $region106: #{tpu_custom_call.1} parent=55 // pred_check_branch
          %754 = sbr.rel (%p752) target = $region108
        $region107: #{tpu_custom_call.1} parent=55 // pred_region
          %755 = dma.done [#allocation19], 128
        $region108: #{tpu_custom_call.1} parent=55 // pred_fallthru
          _
        // Predicated region
        $region109: #{tpu_custom_call.1} parent=55 // pred_check
          %p756 = pneg %p349
        $region110: #{tpu_custom_call.1} parent=55 // pred_check_branch
          %758 = sbr.rel (%p756) target = $region112
        $region111: #{tpu_custom_call.1} parent=55 // pred_region
          %759 = dma.done [#allocation19], 128
        $region112: #{tpu_custom_call.1} parent=55 // pred_fallthru
          _
      $region56: #{tpu_custom_call.1} parent=5 // pred_fallthru
        _
      %p760 = scmp.le.s32.totalorder 2, %s29
      // Predicated region
      $region113: #{tpu_custom_call.1} parent=5 // pred_check
        %p761 = pneg %p760
      $region114: #{tpu_custom_call.1} parent=5 // pred_check_branch
        %763 = sbr.rel (%p761) target = $region116
      $region115: #{tpu_custom_call.1} parent=5 // pred_region
        %s764 = ssub.s32 %s29, 2
        // Predicated region
        $region117: #{tpu_custom_call.1} parent=115 // pred_check
          %p765 = pneg %p303
        $region118: #{tpu_custom_call.1} parent=115 // pred_check_branch
          %767 = sbr.rel (%p765) target = $region120
        $region119: #{tpu_custom_call.1} parent=115 // pred_region
          %s768 = sand.u32 %s288, 1
          %s769 = scalar_lea.sflag [#allocation5], %s768
          %s770 = sand.u32 %s288, 1
          %s771 = smul.addr %s770, 8
          %s772 = scalar_lea.vmem [#allocation17], %s771
          %773 = dma.done %s769, 128
        $region120: #{tpu_custom_call.1} parent=115 // pred_fallthru
          _
      $region116: #{tpu_custom_call.1} parent=5 // pred_fallthru
        _
    $region6: #{tpu_custom_call.1} parent=1 // loop_footer
      %s33 = sadd.s32 1, %s29
    $region7: #{tpu_custom_call.1} parent=1 // loop_footer_branch
      %28 = sbr.rel target = $region3
    $region8: #{tpu_custom_call.1} parent=1 // loop_exit
      _
    %774 = vsyncpa [#allocation4], 1
    %s775 = scalar_lea.sflag [#allocation4], 1
    %776 = vsyncpa %s775, 1
    %777 = vsyncpa [#allocation7], 1
    %778 = vsyncpa [#allocation10], 1
    %779 = vsyncpa [#allocation13], 1
    %780 = vsyncpa [#allocation16], 1
    %781 = vsyncpa [#allocation5], 1
    %s782 = scalar_lea.sflag [#allocation5], 1
    %783 = vsyncpa %s782, 1
    %784 = vsyncpa [#allocation19], 1

</llo_original>
